<compile_context>
chip_gen: v5e
topology: v5e:2x2
jax: 0.10.0
libtpu: 0.0.40
codegen_flags: <defaults>
</compile_context>

<pallas_src>
import functools

import jax
import jax.numpy as jnp
from jax.experimental import pallas as pl
from jax.experimental.pallas import tpu as pltpu

BN_EPS = 1e-5


def _round_up(x, m):
    return -(-x // m) * m


def _vmem_capacity_bytes():
    """Per-core VMEM capacity; conservative fallback if the query is missing."""
    try:
        info = pltpu.get_tpu_info()
        for attr in ("vmem_capacity_bytes", "vmem_bytes", "vmem_size_bytes"):
            v = getattr(info, attr, None)
            if v:
                return int(v)
    except Exception:
        pass
    return 64 * 1024 * 1024  # v7x per-TC size (smallest of v5e/v6e/v7x)


def _conv_bn_silu_kernel(x_ref, w_ref, b_ref, o_ref, acc_ref, *, K, Wp, L):
    """One (batch, row-tile) grid step.

    x_ref:   (1, C_in_p, Lw)      bf16 zero-padded input window, rows flattened
                                  onto the lane axis (Wp columns per row)
    w_ref:   (K*K, C_out, C_in_p) bf16 conv weights with BN scale folded in
    b_ref:   (C_out, 1)           f32 folded BN shift
    o_ref:   (1, C_out, L)        output tile on the padded-width grid
    acc_ref: (C_out, L)           f32 accumulator scratch
    """

    def tap_dot(dy, dx):
        off = dy * Wp + dx                        # static tap offset
        tap = x_ref[0, :, pl.ds(off, L)]          # (C_in_p, L) bf16
        w_t = w_ref[dy * K + dx]                  # (C_out, C_in_p) bf16
        return jnp.dot(w_t, tap, preferred_element_type=jnp.float32)

    if K == 1:
        acc = tap_dot(0, 0)                       # 1x1: keep in vregs
    else:
        acc_ref[...] = tap_dot(0, 0)              # first tap overwrites scratch
        for dx in range(K):                       # static K*K tap loop
            for dy in range(K):
                if dx == 0 and dy == 0:
                    continue
                acc_ref[...] += tap_dot(dy, dx)
        acc = acc_ref[...]

    y = acc + b_ref[...]                          # folded BN shift (scale is in w)
    y = y * pl.reciprocal(1.0 + jnp.exp(-y), approx=True)   # SiLU on the EUP
    o_ref[0] = y.astype(o_ref.dtype)


def _pick_tiling(H, W, p, K, C_in_p, C_out, out_itemsize, ws_budget):
    """Choose (rows per tile T, padded width Wp, n_row_tiles)."""
    halo = (K - 1) + (1 if K > 1 else 0)
    Wp1 = W + 2 * p

    def working_set(T, Wp):
        in_b = 2 * C_in_p * (T + halo) * Wp * 2        # bf16, double-buffered
        out_b = 2 * C_out * T * Wp * out_itemsize      # double-buffered
        acc_b = 4 * C_out * T * Wp                     # f32 scratch
        w_b = 2 * K * K * C_out * C_in_p * 2
        return in_b + out_b + acc_b + w_b

    # Small images that fit the budget: one tile per image, minimal padding.
    if H <= 64 and working_set(H, Wp1) <= ws_budget:
        return H, Wp1, 1

    # Multi-tile: keep the output lane length T*Wp a multiple of 128
    # (unmasked stores, legal partial blocks): Wp % 16 == 0 and T % 8 == 0.
    Wp = _round_up(Wp1, 16)
    T = min(64, _round_up(H, 8))
    while T > 8 and working_set(T, Wp) > ws_budget:
        T -= 8
    return T, Wp, -(-H // T)


def conv_forward(x, weight, bn_gamma, bn_beta, bn_mean, bn_var, *, eps=BN_EPS):
    """Forward of ultralytics Conv (eval-mode BN). stride=1, groups=1, dilation=1."""
    B, C_in, H, W = x.shape
    C_out, C_in_w, K, K2 = weight.shape
    assert K == K2 and C_in_w == C_in and K % 2 == 1, "odd k, groups=1 only"

    p = K // 2                                    # autopad(k) for d=1 ('same')
    halo = (K - 1) + (1 if K > 1 else 0)          # +1 row so every tap slice fits
    C_in_p = _round_up(C_in, 8)                   # sublane-friendly contraction dim
    out_dtype = x.dtype
    out_itemsize = jnp.dtype(out_dtype).itemsize

    # Per-generation VMEM sizing (v7x: 64 MiB, v5e/v6e: 128 MiB per core).
    vmem_cap = _vmem_capacity_bytes()
    vmem_limit = min(int(vmem_cap * 0.75), 110 * 1024 * 1024)
    ws_budget = min(int(vmem_cap * 0.62), 100 * 1024 * 1024)

    T, Wp, n_tiles = _pick_tiling(H, W, p, K, C_in_p, C_out, out_itemsize, ws_budget)
    R_win = T + halo                              # input rows per window (w/ halo)
    Hp = n_tiles * T + halo                       # total padded rows
    L = T * Wp                                    # output lanes per tile

    # Zero-pad (channels, 'same' halo, row-tile remainder, width alignment) and
    # cast the activations to bf16 for the MXU.
    xb = x.astype(jnp.bfloat16)
    xp = jnp.pad(xb, ((0, 0), (0, C_in_p - C_in), (p, Hp - p - H), (p, Wp - p - W)))

    Lw = R_win * Wp
    Lw_pad = _round_up(Lw, 128) if n_tiles > 1 else Lw
    if n_tiles == 1:
        xw = xp.reshape(B, C_in_p, Lw)            # free reshape (whole image)
    else:
        # Stack overlapping row windows so each grid step gets a contiguous,
        # lane-dense (C_in_p, Lw_pad) block via a plain BlockSpec.
        wins = jnp.stack(
            [xp[:, :, i * T:i * T + R_win, :] for i in range(n_tiles)], axis=2)
        xw = wins.reshape(B, C_in_p, n_tiles, Lw)
        if Lw_pad != Lw:
            xw = jnp.pad(xw, ((0, 0), (0, 0), (0, 0), (0, Lw_pad - Lw)))
        xw = xw.reshape(B, C_in_p, n_tiles * Lw_pad)
    assert (K - 1) * Wp + (K - 1) + L <= Lw_pad

    # Fold eval-mode BatchNorm: scale into the weights (one-time prep), shift
    # stays in the kernel epilogue.
    scale = bn_gamma / jnp.sqrt(bn_var + eps)
    shift = (bn_beta - bn_mean * scale).reshape(C_out, 1).astype(jnp.float32)
    w_f = weight.astype(jnp.float32) * scale[:, None, None, None]
    w_taps = jnp.transpose(w_f.reshape(C_out, C_in, K * K), (2, 0, 1))
    w_taps = jnp.pad(w_taps, ((0, 0), (0, 0), (0, C_in_p - C_in))).astype(jnp.bfloat16)

    kernel = functools.partial(_conv_bn_silu_kernel, K=K, Wp=Wp, L=L)

    out = pl.pallas_call(
        kernel,
        out_shape=jax.ShapeDtypeStruct((B, C_out, n_tiles * L), out_dtype),
        grid_spec=pltpu.PrefetchScalarGridSpec(
            num_scalar_prefetch=0,
            grid=(B, n_tiles),
            in_specs=[
                pl.BlockSpec((1, C_in_p, Lw_pad), lambda b, i: (b, 0, i)),
                pl.BlockSpec((K * K, C_out, C_in_p), lambda b, i: (0, 0, 0)),
                pl.BlockSpec((C_out, 1), lambda b, i: (0, 0)),
            ],
            out_specs=pl.BlockSpec((1, C_out, L), lambda b, i: (b, 0, i)),
            scratch_shapes=[pltpu.VMEM((C_out, L), jnp.float32)],
        ),
        compiler_params=pltpu.CompilerParams(
            dimension_semantics=("parallel", "parallel"),   # batch x row-tiles
            vmem_limit_bytes=vmem_limit,
        ),
    )(xw, w_taps, shift)

    # (B, C_out, n_tiles*T*Wp) -> (B, C_out, rows, Wp) is a free reshape; crop
    # padded rows/columns (tiny epilogue copy).
    return out.reshape(B, C_out, n_tiles * T, Wp)[:, :, :H, :W]


if __name__ == "__main__":
    key = jax.random.PRNGKey(0)

    def ref_forward(x, w, gamma, beta, mean, var, k):
        # Reference with bf16-rounded operands (what the MXU sees), f32 accum.
        p = k // 2
        scale = gamma / jnp.sqrt(var + BN_EPS)
        shift = beta - mean * scale
        wf = (w * scale[:, None, None, None]).astype(jnp.bfloat16).astype(jnp.float32)
        xb = x.astype(jnp.bfloat16).astype(jnp.float32)
        y = jax.lax.conv_general_dilated(
            xb, wf, window_strides=(1, 1), padding=((p, p), (p, p)),
            dimension_numbers=("NCHW", "OIHW", "NCHW"),
            precision=jax.lax.Precision.HIGHEST)
        y = y + shift.reshape(1, -1, 1, 1)
        return y * jax.nn.sigmoid(y)

    # (k, c1, c2, B, H, W): default 1x1 Conv, a 3x3 Conv, and a 3x3 case big
    # enough to exercise the multi-row-tile path (n_tiles > 1, B = 1).
    cases = ((1, 4, 16, 2, 16, 16),
             (3, 4, 8, 2, 16, 16),
             (3, 8, 8, 1, 72, 72))
    for k, c1, c2, B, H, W in cases:
        key, kx, kw, kg, kb, km, kv = jax.random.split(key, 7)
        x = jax.random.normal(kx, (B, c1, H, W), dtype=jnp.float32)
        w = 0.1 * jax.random.normal(kw, (c2, c1, k, k), dtype=jnp.float32)
        gamma = 1.0 + 0.1 * jax.random.normal(kg, (c2,), dtype=jnp.float32)
        beta = 0.1 * jax.random.normal(kb, (c2,), dtype=jnp.float32)
        mean = 0.1 * jax.random.normal(km, (c2,), dtype=jnp.float32)
        var = jnp.abs(jax.random.normal(kv, (c2,), dtype=jnp.float32)) + 0.5

        out = jax.block_until_ready(conv_forward(x, w, gamma, beta, mean, var))
        ref = ref_forward(x, w, gamma, beta, mean, var, k)
        assert out.shape == ref.shape, f"shape mismatch for k={k}"
        err = float(jnp.max(jnp.abs(out - ref)))
        assert jnp.allclose(out, ref, atol=3e-2, rtol=3e-2), \
            f"mismatch for k={k}, HxW={H}x{W}: max abs err {err}"

    print("KERNEL_OK")
</pallas_src>

<mosaic_0001>
module attributes {stable_mosaic.version = 11 : i64} {
  func.func @_conv_bn_silu_kernel(%arg0: i32, %arg1: i32, %arg2: memref<1x8x256xbf16, #tpu.memory_space<vmem>>, %arg3: memref<1x16x8xbf16, #tpu.memory_space<vmem>>, %arg4: memref<16x1xf32, #tpu.memory_space<vmem>>, %arg5: memref<1x16x256xf32, #tpu.memory_space<vmem>>, %arg6: memref<16x256xf32, #tpu.memory_space<vmem>>) attributes {dimension_semantics = [#tpu.dimension_semantics<parallel>, #tpu.dimension_semantics<parallel>], iteration_bounds = array<i64: 2, 1>, scalar_prefetch = 0 : i64, scratch_operands = 1 : i64, tpu.core_type = #tpu.core_type<tc>, window_params = [{transform_indices = @transform_0, window_bounds = array<i64: 1, 8, 256>}, {pipeline_mode = #tpu.pipeline_mode<synchronous>, transform_indices = @transform_1, window_bounds = array<i64: 1, 16, 8>}, {pipeline_mode = #tpu.pipeline_mode<synchronous>, transform_indices = @transform_2, window_bounds = array<i64: 16, 1>}, {transform_indices = @transform_3, window_bounds = array<i64: 1, 16, 256>}]} {
    %c0 = arith.constant 0 : index
    %c0_0 = arith.constant 0 : index
    %c0_1 = arith.constant 0 : index
    %0 = vector.load %arg2[%c0, %c0_0, %c0_1] : memref<1x8x256xbf16, #tpu.memory_space<vmem>>, vector<1x8x256xbf16>
    %1 = vector.shape_cast %0 : vector<1x8x256xbf16> to vector<8x256xbf16>
    %c0_2 = arith.constant 0 : index
    %c0_3 = arith.constant 0 : index
    %c0_4 = arith.constant 0 : index
    %2 = vector.load %arg3[%c0_2, %c0_3, %c0_4] : memref<1x16x8xbf16, #tpu.memory_space<vmem>>, vector<1x16x8xbf16>
    %3 = vector.shape_cast %2 : vector<1x16x8xbf16> to vector<16x8xbf16>
    %cst = arith.constant dense<0.000000e+00> : vector<16x256xf32>
    %4 = tpu.matmul %3, %1, %cst {dimension_numbers = #tpu.dot_dimension_numbers<[1], [0], [0], [1], [0, 0, 1, 1], [], []>} : vector<16x8xbf16>, vector<8x256xbf16>, vector<16x256xf32> -> vector<16x256xf32>
    %c0_5 = arith.constant 0 : index
    %c0_6 = arith.constant 0 : index
    %5 = vector.load %arg4[%c0_5, %c0_6] : memref<16x1xf32, #tpu.memory_space<vmem>>, vector<16x1xf32>
    %6 = vector.broadcast %5 : vector<16x1xf32> to vector<16x256xf32>
    %7 = arith.addf %4, %6 : vector<16x256xf32>
    %cst_7 = arith.constant 0.000000e+00 : f32
    %8 = vector.broadcast %cst_7 : f32 to vector<16x256xf32>
    %9 = arith.subf %8, %7 : vector<16x256xf32>
    %10 = math.exp %9 : vector<16x256xf32>
    %cst_8 = arith.constant 1.000000e+00 : f32
    %11 = vector.broadcast %cst_8 : f32 to vector<16x256xf32>
    %12 = arith.addf %11, %10 : vector<16x256xf32>
    %13 = tpu.reciprocal %12 {approx = true} : vector<16x256xf32> -> vector<16x256xf32>
    %14 = arith.mulf %7, %13 : vector<16x256xf32>
    %c0_9 = arith.constant 0 : index
    %c0_10 = arith.constant 0 : index
    %c0_11 = arith.constant 0 : index
    %15 = vector.load %arg5[%c0_9, %c0_10, %c0_11] : memref<1x16x256xf32, #tpu.memory_space<vmem>>, vector<1x16x256xf32>
    %16 = vector.shape_cast %15 : vector<1x16x256xf32> to vector<16x256xf32>
    %17 = vector.shape_cast %14 : vector<16x256xf32> to vector<1x16x256xf32>
    tpu.vector_store %arg5[%c0_9, %c0_10, %c0_11], %17 {strides = array<i32>} : memref<1x16x256xf32, #tpu.memory_space<vmem>>, vector<1x16x256xf32>,
    return
  }
  func.func @transform_0(%arg0: i32, %arg1: i32) -> (i32, i32, i32) {
    %c0_i32 = arith.constant 0 : i32
    %c0_i32_0 = arith.constant 0 : i32
    return %arg0, %c0_i32, %arg1 : i32, i32, i32
  }
  func.func @transform_1(%arg0: i32, %arg1: i32) -> (i32, i32, i32) {
    %c0_i32 = arith.constant 0 : i32
    %c0_i32_0 = arith.constant 0 : i32
    %c0_i32_1 = arith.constant 0 : i32
    %c0_i32_2 = arith.constant 0 : i32
    return %c0_i32, %c0_i32_0, %c0_i32_1 : i32, i32, i32
  }
  func.func @transform_2(%arg0: i32, %arg1: i32) -> (i32, i32) {
    %c0_i32 = arith.constant 0 : i32
    %c0_i32_0 = arith.constant 0 : i32
    %c0_i32_1 = arith.constant 0 : i32
    return %c0_i32, %c0_i32_0 : i32, i32
  }
  func.func @transform_3(%arg0: i32, %arg1: i32) -> (i32, i32, i32) {
    %c0_i32 = arith.constant 0 : i32
    %c0_i32_0 = arith.constant 0 : i32
    return %arg0, %c0_i32, %arg1 : i32, i32, i32
  }
}

</mosaic_0001>

<llo_original>
// kernel: tpu_custom_call.1
$region0: #{tpu_custom_call.1}
  #allocation0 [shape = 'u32[]', space=smem, size = 0x4, offset = 0x4, fixed_abs, tag = 'smem constant byte address 0x4 - core index']
  #allocation1 [shape = 'u32[72,128]{1,0:T(1,128)}', space=vmem, size = 0x9000, scoped, tag = 'internal scratch']
  #allocation2 [shape = 'f32[16,256]{1,0:T(8,128)}', space=vmem, size = 0x4000, scoped, tag = 'scratch operand']
  %s0 = inlined_call_operand.vmem [shape: bf16[2,8,256], index: 0, kind: input, shape index: {}]
  %s1 = inlined_call_operand.vmem [shape: bf16[1,16,8], index: 1, kind: input, shape index: {}]
  %s2 = inlined_call_operand.vmem [shape: f32[16,1], index: 2, kind: input, shape index: {}]
  %s3 = inlined_call_operand.hbm [shape: f32[2,16,256], index: 3, kind: output, shape index: {}]
  %s4 = sld [smem:[#allocation0]]
  $region45: #{tpu_custom_call.1} parent=0
    _
  %s6 = ssub.s32 1, %s4
  %s7 = scalar_select 0, %s6, %s4
  $region1: #{tpu_custom_call.1} parent=0
    #allocation3 [shape = 'u8[32768]{0}', space=vmem, size = 0x8000, scoped, tag = 'output window, operand 0']
    #allocation4 [shape = 's32[2]{0}', space=sflag, size = 0x8, scoped, tag = 'scoped memory for tpu_custom_call.1']
    %8 = vsyncpa [#allocation4], 0
    %s9 = scalar_lea.sflag [#allocation4], 1
    %10 = vsyncpa %s9, 0
    loop: start=0, step=1, limit=4
    $region2: #{tpu_custom_call.1} parent=1 // loop_pre_header
      _
    $region3: #{tpu_custom_call.1} parent=1 // loop_header
      %s12 = sphi 0, %s16
      %p13 = scmp.ge.s32.totalorder %s12, 4
      %s19 = sphi 0, %s31
      %s20 = sphi 0, %s27
      %s21 = sphi 0, %s19
      %s22 = sphi 0, %s20
      %s23 = sphi 0, %s21
      %s24 = sphi 0, %s22
      %s36 = sphi 0, %s38
      %s39 = sphi 0, %s36
      %s40 = sphi 0, %s39
      %s56 = sphi 0, %s40
      %s60 = sphi 0, %s60
      %s62 = sphi 0, %s60
      %s63 = sphi 0, %s62
      %s77 = sphi 0, %s63
      %s81 = sphi 0, %s81
      %s83 = sphi 0, %s81
      %s84 = sphi 0, %s83
      %s98 = sphi 0, %s84
      %s106 = sphi 0, %s108
      %s109 = sphi 0, %s106
      %s110 = sphi 0, %s109
      %s126 = sphi 0, %s110
    $region4: #{tpu_custom_call.1} parent=1 // loop_header_branch
      %15 = sbr.rel (%p13) target = $region8
    $region5: #{tpu_custom_call.1} parent=1 // loop_body
      %s17 = ssub.s32 %s12, 1
      %s18 = ssub.s32 %s12, 2
      %s25 = sadd.s32 1, %s20
      %p26 = scmp.ge.s32.totalorder %s25, 1
      %s27 = scalar_select %p26, 0, %s25
      %s28 = sadd.s32 1, %s19
      %s29 = scalar_select %p26, %s28, %s19
      %p30 = scmp.ge.s32.totalorder %s29, 2
      %s31 = scalar_select %p30, 0, %s29
      %s32 = ssub.s32 %s19, %s31
      %s33 = ssub.s32 %s20, %s27
      %s34 = sor.u32 %s32, %s33
      %p35 = scmp.eq.s32.totalorder %s34, 0
      %s37 = sadd.s32 %s36, 1
      %s38 = scalar_select %p35, %s36, %s37
      %p41 = pneg %p35
      %p42 = scmp.eq.s32.totalorder %s12, 1
      %p43 = por %p41, %p42
      %p44 = scmp.ne.s32.totalorder %s36, %s39
      %p45 = scmp.eq.s32.totalorder %s12, 0
      %p46 = por %p44, %p45
      %p47 = scmp.ne.s32.totalorder %s36, %s39
      %p48 = scmp.eq.s32.totalorder %s17, 1
      %p49 = por %p47, %p48
      %p50 = scmp.ne.s32.totalorder %s39, %s40
      %p51 = scmp.eq.s32.totalorder %s17, 0
      %p52 = por %p50, %p51
      %p53 = scmp.ne.s32.totalorder %s39, %s40
      %p54 = scmp.eq.s32.totalorder %s18, 1
      %p55 = por %p53, %p54
      %p57 = scmp.ne.s32.totalorder %s40, %s56
      %p58 = scmp.eq.s32.totalorder %s18, 0
      %p59 = por %p57, %p58
      %s61 = sadd.s32 %s60, 1
      %p64 = scmp.eq.s32.totalorder %s12, 1
      %p65 = scmp.ne.s32.totalorder %s60, %s62
      %p66 = scmp.eq.s32.totalorder %s12, 0
      %p67 = por %p65, %p66
      %p68 = scmp.ne.s32.totalorder %s60, %s62
      %p69 = scmp.eq.s32.totalorder %s17, 1
      %p70 = por %p68, %p69
      %p71 = scmp.ne.s32.totalorder %s62, %s63
      %p72 = scmp.eq.s32.totalorder %s17, 0
      %p73 = por %p71, %p72
      %p74 = scmp.ne.s32.totalorder %s62, %s63
      %p75 = scmp.eq.s32.totalorder %s18, 1
      %p76 = por %p74, %p75
      %p78 = scmp.ne.s32.totalorder %s63, %s77
      %p79 = scmp.eq.s32.totalorder %s18, 0
      %p80 = por %p78, %p79
      %s82 = sadd.s32 %s81, 1
      %p85 = scmp.eq.s32.totalorder %s12, 1
      %p86 = scmp.ne.s32.totalorder %s81, %s83
      %p87 = scmp.eq.s32.totalorder %s12, 0
      %p88 = por %p86, %p87
      %p89 = scmp.ne.s32.totalorder %s81, %s83
      %p90 = scmp.eq.s32.totalorder %s17, 1
      %p91 = por %p89, %p90
      %p92 = scmp.ne.s32.totalorder %s83, %s84
      %p93 = scmp.eq.s32.totalorder %s17, 0
      %p94 = por %p92, %p93
      %p95 = scmp.ne.s32.totalorder %s83, %s84
      %p96 = scmp.eq.s32.totalorder %s18, 1
      %p97 = por %p95, %p96
      %p99 = scmp.ne.s32.totalorder %s84, %s98
      %p100 = scmp.eq.s32.totalorder %s18, 0
      %p101 = por %p99, %p100
      %s102 = ssub.s32 %s19, %s31
      %s103 = ssub.s32 %s20, %s27
      %s104 = sor.u32 %s102, %s103
      %p105 = scmp.eq.s32.totalorder %s104, 0
      %s107 = sadd.s32 %s106, 1
      %s108 = scalar_select %p105, %s106, %s107
      %p111 = pneg %p105
      %p112 = scmp.eq.s32.totalorder %s12, 1
      %p113 = por %p111, %p112
      %p114 = scmp.ne.s32.totalorder %s106, %s109
      %p115 = scmp.eq.s32.totalorder %s12, 0
      %p116 = por %p114, %p115
      %p117 = scmp.ne.s32.totalorder %s106, %s109
      %p118 = scmp.eq.s32.totalorder %s17, 1
      %p119 = por %p117, %p118
      %p120 = scmp.ne.s32.totalorder %s109, %s110
      %p121 = scmp.eq.s32.totalorder %s17, 0
      %p122 = por %p120, %p121
      %p123 = scmp.ne.s32.totalorder %s109, %s110
      %p124 = scmp.eq.s32.totalorder %s18, 1
      %p125 = por %p123, %p124
      %p127 = scmp.ne.s32.totalorder %s110, %s126
      %p128 = scmp.eq.s32.totalorder %s18, 0
      %p129 = por %p127, %p128
      %p130 = scmp.le.s32.totalorder 1, %s12
      %p131 = scmp.lt.s32.totalorder %s12, 3
      %p132 = pnand %p130, %p131
      %p133 = pneg %p132
      // Predicated region
      $region9: #{tpu_custom_call.1} parent=5 // pred_check
        _
      $region10: #{tpu_custom_call.1} parent=5 // pred_check_branch
        %135 = sbr.rel (%p132) target = $region12
      $region11: #{tpu_custom_call.1} parent=5 // pred_region
        %s136 = ssub.s32 %s12, 1
        // Predicated region
        $region13: #{tpu_custom_call.1} parent=11 // pred_check
          %p137 = pneg %p73
        $region14: #{tpu_custom_call.1} parent=11 // pred_check_branch
          %139 = sbr.rel (%p137) target = $region16
        $region15: #{tpu_custom_call.1} parent=11 // pred_region
          _
        $region16: #{tpu_custom_call.1} parent=11 // pred_fallthru
          _
        // Predicated region
        $region17: #{tpu_custom_call.1} parent=11 // pred_check
          %p140 = pneg %p94
        $region18: #{tpu_custom_call.1} parent=11 // pred_check_branch
          %142 = sbr.rel (%p140) target = $region20
        $region19: #{tpu_custom_call.1} parent=11 // pred_region
          _
        $region20: #{tpu_custom_call.1} parent=11 // pred_fallthru
          _
      $region12: #{tpu_custom_call.1} parent=5 // pred_fallthru
        _
      %p143 = scmp.lt.s32.totalorder %s12, 2
      // Predicated region
      $region21: #{tpu_custom_call.1} parent=5 // pred_check
        %p144 = pneg %p143
      $region22: #{tpu_custom_call.1} parent=5 // pred_check_branch
        %146 = sbr.rel (%p144) target = $region24
      $region23: #{tpu_custom_call.1} parent=5 // pred_region
        // Predicated region
        $region25: #{tpu_custom_call.1} parent=23 // pred_check
          %p147 = pneg %p46
        $region26: #{tpu_custom_call.1} parent=23 // pred_check_branch
          %149 = sbr.rel (%p147) target = $region28
        $region27: #{tpu_custom_call.1} parent=23 // pred_region
          %s150 = smul.u32 2, %s20
          %p151 = scmp.lt.s32.totalorder %s19, 1
          %s152 = scalar_select %p151, %s19, 1
          %p153 = scmp.lt.s32.totalorder %s150, 1
          %s154 = scalar_select %p153, %s150, 1
          %s155 = smul.addr %s152, 2
          %s156 = sadd.s32 %s154, %s155
          %s157 = smul.addr %s156, 4
          %s158 = scalar_lea.vmem %s0, %s157
          %s159 = smul.u32 2, %s20
        $region28: #{tpu_custom_call.1} parent=23 // pred_fallthru
          _
      $region24: #{tpu_custom_call.1} parent=5 // pred_fallthru
        _
      %p160 = scmp.le.s32.totalorder 1, %s12
      %p161 = scmp.lt.s32.totalorder %s12, 3
      %p162 = pnand %p160, %p161
      %p163 = pneg %p162
      // Predicated region
      $region29: #{tpu_custom_call.1} parent=5 // pred_check
        _
      $region30: #{tpu_custom_call.1} parent=5 // pred_check_branch
        %165 = sbr.rel (%p162) target = $region32
      $region31: #{tpu_custom_call.1} parent=5 // pred_region
        %s166 = ssub.s32 %s12, 1
        %s167 = smul.u32 2, %s22
        %p168 = scmp.lt.s32.totalorder %s21, 1
        %s169 = scalar_select %p168, %s21, 1
        %p170 = scmp.lt.s32.totalorder %s167, 1
        %s171 = scalar_select %p170, %s167, 1
        %s172 = smul.addr %s169, 2
        %s173 = sadd.s32 %s171, %s172
        %s174 = smul.addr %s173, 4
        %s175 = scalar_lea.vmem %s0, %s174
        %p176 = pneg %p52
        %p177 = pneg %p49
        %p178 = pneg %p73
        %p179 = pneg %p70
        %p180 = pneg %p94
        %p181 = pneg %p91
        %p182 = pneg %p122
        %p183 = pneg %p119
        %s184 = sand.u32 %s109, 1
        %s185 = scalar_lea.sflag [#allocation4], %s184
        %s186 = sand.u32 %s109, 1
        %s187 = smul.addr %s186, 32
        %s188 = scalar_lea.vmem [#allocation3], %s187
        %s189 = smul.u32 2, %s22
        %p190 = scmp.lt.s32.totalorder %s21, 1
        %s191 = scalar_select %p190, %s21, 1
        %p192 = scmp.lt.s32.totalorder %s189, 1
        %s193 = scalar_select %p192, %s189, 1
        %s194 = smul.addr %s191, 2
        %s195 = sadd.s32 %s193, %s194
        %s196 = smul.addr %s195, 4
        %s197 = scalar_lea.vmem %s0, %s196
        %s198 = smul.u32 2, %s22
        %s199 = smul.u32 2, %s22
        %v201 = vld [vmem:[%s197] sm:$0xff]
        %v202 = vld [vmem:[%s1] sm:$0xf]
        %v203 = vld [vmem:[%s1 + $0x4] sm:$0xf]
        %v204 = vld [vmem:[%s2] sm:$0xff]
        %v205 = vld [vmem:[%s2 + $0x8] sm:$0xff]
        %207 = vset.pattern.permute.xlu0 0
        %208 = vperm.xlu0 %207, %v204
        %v209 = vpop.permute.xlu0 %208
        %212 = vset.pattern.permute.xlu0 0
        %213 = vperm.xlu0 %212, %v205
        %v214 = vpop.permute.xlu0 %213
        %v218 = vunpack.c.l.b16 %v202
        %v219 = vunpack.c.l.b16 %v203
        %v220 = vpack.c.b16 %v219, %v218
        %v222 = vunpack.c.l.b16 %v201
        %v223 = vunpack.c.h.b16 %v201
        %v224 = vpack.c.b16 %v222, %v222
        %v225 = vpack.c.b16 %v223, %v223
        %vm226 = vcmask 64512
        %v228 = vsel %vm226, %v220, 0
        %vm230 = vcmask 1043456
        %v232 = vsel %vm230, %v224, 0
        %v235 = vsel %vm230, %v225, 0
        %237 = vmatpush.bf16.msra.mxu0 0
        %238 = vmatpush.bf16.msra.mxu0 0
        %239 = vmatpush.bf16.msra.mxu0 0
        %240 = vmatpush.bf16.msra.mxu0 0
        %241 = vmatpush.bf16.msra.mxu0 0
        %242 = vmatpush.bf16.msra.mxu0 0
        %243 = vmatpush.bf16.msra.mxu0 0
        %244 = vmatpush.bf16.msra.mxu0 %v232
        %245 = vmatmul.bf16.gmra.mxu0 %v228
        %v246 = vpop.f32.mrf.mxu0
        %v247 = vadd.f32 %v209, %v246
        %v248 = vpop.f32.mrf.mxu0
        %v249 = vadd.f32 %v214, %v248
        %250 = vdwg.mxu0
        %251 = vmatpush.bf16.msra.mxu0 0
        %252 = vmatpush.bf16.msra.mxu0 0
        %253 = vmatpush.bf16.msra.mxu0 0
        %254 = vmatpush.bf16.msra.mxu0 0
        %255 = vmatpush.bf16.msra.mxu0 0
        %256 = vmatpush.bf16.msra.mxu0 0
        %257 = vmatpush.bf16.msra.mxu0 0
        %258 = vmatpush.bf16.msra.mxu0 %v235
        %259 = vmatmul.bf16.gmra.mxu0 %v228
        %v260 = vpop.f32.mrf.mxu0
        %v261 = vadd.f32 %v209, %v260
        %v262 = vpop.f32.mrf.mxu0
        %v263 = vadd.f32 %v214, %v262
        %264 = vdwg.mxu0
        %v265 = vsub.f32 0.0, %v247
        %v266 = vsub.f32 0.0, %v261
        %v267 = vsub.f32 0.0, %v249
        %v268 = vsub.f32 0.0, %v263
        %v269 = vmul.f32 %v265, 1.442695
        %v270 = vpow.pop %v269
        %v271 = vmul.f32 %v266, 1.442695
        %v272 = vpow.pop %v271
        %v273 = vmul.f32 %v267, 1.442695
        %v274 = vpow.pop %v273
        %v275 = vmul.f32 %v268, 1.442695
        %v276 = vpow.pop %v275
        %v277 = vadd.f32 %v270, 1.0
        %v278 = vadd.f32 %v272, 1.0
        %v279 = vadd.f32 %v274, 1.0
        %v280 = vadd.f32 %v276, 1.0
        %v281 = vrcp.pop %v277
        %v282 = vrcp.pop %v278
        %v283 = vrcp.pop %v279
        %v284 = vrcp.pop %v280
        %v285 = vmul.f32 %v247, %v281
        %v286 = vmul.f32 %v261, %v282
        %v287 = vmul.f32 %v249, %v283
        %v288 = vmul.f32 %v263, %v284
        %289 = vst [vmem:[%s188] sm:$0xff] %v285
        %290 = vst [vmem:[%s188 + $0x8] sm:$0xff] %v286
        %291 = vst [vmem:[%s188 + $0x10] sm:$0xff] %v287
        %292 = vst [vmem:[%s188 + $0x18] sm:$0xff] %v288
        %s293 = sand.u32 %s109, 1
        %s294 = scalar_lea.sflag [#allocation4], %s293
        %s295 = sand.u32 %s109, 1
        %s296 = smul.addr %s295, 32
        %s297 = scalar_lea.vmem [#allocation3], %s296
        // Predicated region
        $region33: #{tpu_custom_call.1} parent=31 // pred_check
          %p298 = pneg %p119
        $region34: #{tpu_custom_call.1} parent=31 // pred_check_branch
          %300 = sbr.rel (%p298) target = $region36
        $region35: #{tpu_custom_call.1} parent=31 // pred_region
          %s301 = smul.u32 2, %s22
          %303 = vsyncadd %s294, 0
          %s304 = smul.addr %s21, 4
          %s305 = sadd.s32 %s301, %s304
          %s306 = smul.addr %s305, 8
          %s307 = scalar_lea.hbm %s3, %s306
          %s308 = sshll.u32 %s297, 4
          %s309 = int_to_ptr.vmem [resolvable:$true] %s308
          %s310 = sshll.u32 %s307, 4
          %s311 = int_to_ptr.hbm [resolvable:$true] %s310
          %316 = dma.vmem_to_hbm [thread:$0]  %s309, 512, %s311, %s294, 256, 256, 16
        $region36: #{tpu_custom_call.1} parent=31 // pred_fallthru
          _
      $region32: #{tpu_custom_call.1} parent=5 // pred_fallthru
        _
      %p317 = scmp.le.s32.totalorder 2, %s12
      // Predicated region
      $region37: #{tpu_custom_call.1} parent=5 // pred_check
        %p318 = pneg %p317
      $region38: #{tpu_custom_call.1} parent=5 // pred_check_branch
        %320 = sbr.rel (%p318) target = $region40
      $region39: #{tpu_custom_call.1} parent=5 // pred_region
        %s321 = ssub.s32 %s12, 2
        // Predicated region
        $region41: #{tpu_custom_call.1} parent=39 // pred_check
          %p322 = pneg %p125
        $region42: #{tpu_custom_call.1} parent=39 // pred_check_branch
          %324 = sbr.rel (%p322) target = $region44
        $region43: #{tpu_custom_call.1} parent=39 // pred_region
          %s325 = sand.u32 %s110, 1
          %s326 = scalar_lea.sflag [#allocation4], %s325
          %s327 = sand.u32 %s110, 1
          %s328 = smul.addr %s327, 32
          %s329 = scalar_lea.vmem [#allocation3], %s328
          %331 = dma.done %s326, 512
        $region44: #{tpu_custom_call.1} parent=39 // pred_fallthru
          _
      $region40: #{tpu_custom_call.1} parent=5 // pred_fallthru
        _
    $region6: #{tpu_custom_call.1} parent=1 // loop_footer
      %s16 = sadd.s32 1, %s12
    $region7: #{tpu_custom_call.1} parent=1 // loop_footer_branch
      %11 = sbr.rel target = $region3
    $region8: #{tpu_custom_call.1} parent=1 // loop_exit
      _
    %332 = vsyncpa [#allocation4], 1
    %s333 = scalar_lea.sflag [#allocation4], 1
    %334 = vsyncpa %s333, 1

</llo_original>
